<compile_context>
chip_gen: v5e
topology: v5e:2x2
jax: 0.10.0
libtpu: 0.0.40
codegen_flags: <defaults>
</compile_context>

<pallas_src>
import jax
import jax.numpy as jnp
from jax.experimental import pallas as pl
from jax.experimental.pallas import tpu as pltpu


def _swish(v):
    # SiLU via a single EUP tanh per element: sigmoid(v) = 0.5 * (tanh(v/2) + 1)
    return 0.5 * v * (jnp.tanh(0.5 * v) + 1.0)


def _round_up(n: int, m: int) -> int:
    return ((n + m - 1) // m) * m


def _make_residual_kernel(act):
    """Fused residual-MLP kernel with a static activation callable."""

    def kernel(x_ref, w1_ref, b1_ref, w2_ref, b2_ref, o_ref):
        x = x_ref[...].astype(jnp.float32)
        # lin1 + act: bf16 MXU operands, f32 accumulate; bias/act in f32.
        h = jnp.dot(
            x.astype(jnp.bfloat16), w1_ref[...],
            preferred_element_type=jnp.float32,
        ) + b1_ref[...]
        h = act(h)
        # lin2 + act
        h = jnp.dot(
            h.astype(jnp.bfloat16), w2_ref[...],
            preferred_element_type=jnp.float32,
        ) + b2_ref[...]
        h = act(h)
        # residual add against the original f32 x
        o_ref[...] = (x + h).astype(o_ref.dtype)

    return kernel


def residual_layer_pallas(x, w1, b1, w2, b2, *, act=_swish, tile_rows: int = 4096):
    """x: [N, H]; w1, w2: [H, H] ([in, out] layout); b1, b2: [H]."""
    assert x.ndim == 2, "expected [N, H] layout"
    N, H = x.shape
    assert w1.shape == (H, H) and w2.shape == (H, H)
    assert b1.shape == (H,) and b2.shape == (H,)
    assert tile_rows % 8 == 0

    itemsize = jnp.dtype(x.dtype).itemsize

    # Row-tile sizing:
    #  - cap each x/out tile at ~2 MiB so double-buffered in+out (~4x tile) plus
    #    resident bf16 weights stays well under v5e's 16 MiB scoped-VMEM default
    #    (and is tiny on v6e/v7x);
    #  - cap at ceil(N/2) rows so the grid has >=2 steps and v7x's two
    #    TensorCores both get work.
    max_rows_by_vmem = max(8, (2 * 1024 * 1024) // (H * itemsize))
    half_rows = _round_up(pl.cdiv(N, 2), 8)
    tm = min(tile_rows, max_rows_by_vmem, half_rows)
    tm = max(8, (tm // 8) * 8)

    # No host-side padding: Pallas masks the writeback of the partial last block.
    grid = (pl.cdiv(N, tm),)

    # Weights live resident in VMEM; store them bf16 (MXU operands anyway).
    w1_b = w1.astype(jnp.bfloat16)
    w2_b = w2.astype(jnp.bfloat16)
    b1_2d = b1.reshape(1, H).astype(jnp.float32)
    b2_2d = b2.reshape(1, H).astype(jnp.float32)

    kernel = _make_residual_kernel(act)

    cost = pl.CostEstimate(
        flops=4 * N * H * H,                     # two [N,H]x[H,H] matmuls
        transcendentals=2 * N * H,               # one tanh per element per act
        bytes_accessed=2 * N * H * itemsize      # read x + write out
        + 2 * H * H * 2                          # bf16 weights
        + 2 * H * 4,                             # f32 biases
    )

    out = pl.pallas_call(
        kernel,
        out_shape=jax.ShapeDtypeStruct((N, H), x.dtype),
        grid=grid,
        in_specs=[
            pl.BlockSpec((tm, H), lambda i: (i, 0)),   # x row tile (lane-dense)
            pl.BlockSpec((H, H), lambda i: (0, 0)),    # W1 (resident)
            pl.BlockSpec((1, H), lambda i: (0, 0)),    # b1
            pl.BlockSpec((H, H), lambda i: (0, 0)),    # W2 (resident)
            pl.BlockSpec((1, H), lambda i: (0, 0)),    # b2
        ],
        out_specs=pl.BlockSpec((tm, H), lambda i: (i, 0)),
        compiler_params=pltpu.CompilerParams(
            dimension_semantics=("parallel",),   # row tiles shard across TCs
        ),
        cost_estimate=cost,
    )(x, w1_b, b1_2d, w2_b, b2_2d)

    return out


def residual_layer_ref(x, w1, b1, w2, b2, act=_swish):
    """Pure-JAX f32 reference matching the PyTorch module's forward."""
    x = x.astype(jnp.float32)
    h = act(jnp.dot(x, w1) + b1)
    h = act(jnp.dot(h, w2) + b2)
    return x + h


if __name__ == "__main__":
    # TODO(synk): glorot_orthogonal init is host-side parameter setup, not part
    # of the forward pass; scaled-normal weights are used for the demo.
    hidden_channels = 128   # DimeNet default (lane-aligned)
    num_rows = 256          # small demo row count (e.g. number of edges)

    key = jax.random.PRNGKey(0)
    kx, k1, k2, kb1, kb2 = jax.random.split(key, 5)

    scale = (2.0 / (hidden_channels + hidden_channels)) ** 0.5
    x = jax.random.normal(kx, (num_rows, hidden_channels), dtype=jnp.float32)
    w1 = jax.random.normal(k1, (hidden_channels, hidden_channels), jnp.float32) * scale
    w2 = jax.random.normal(k2, (hidden_channels, hidden_channels), jnp.float32) * scale
    # nonzero biases so the bias path is actually exercised
    b1 = jax.random.normal(kb1, (hidden_channels,), jnp.float32) * 0.1
    b2 = jax.random.normal(kb2, (hidden_channels,), jnp.float32) * 0.1

    out = residual_layer_pallas(x, w1, b1, w2, b2)
    out = jax.block_until_ready(out)

    ref = residual_layer_ref(x, w1, b1, w2, b2)
    assert out.shape == ref.shape and out.dtype == ref.dtype
    # Tolerance accounts for bf16 MXU operands (f32 accumulate) vs the f32 ref.
    assert jnp.allclose(out, ref, rtol=2e-2, atol=2e-2), "mismatch vs reference"

    print("KERNEL_OK")
</pallas_src>

<mosaic_0001>
module attributes {stable_mosaic.version = 11 : i64} {
  func.func @kernel(%arg0: i32, %arg1: memref<128x128xf32, #tpu.memory_space<vmem>>, %arg2: memref<128x128xbf16, #tpu.memory_space<vmem>>, %arg3: memref<1x128xf32, #tpu.memory_space<vmem>>, %arg4: memref<128x128xbf16, #tpu.memory_space<vmem>>, %arg5: memref<1x128xf32, #tpu.memory_space<vmem>>, %arg6: memref<128x128xf32, #tpu.memory_space<vmem>>) attributes {dimension_semantics = [#tpu.dimension_semantics<parallel>], iteration_bounds = array<i64: 2>, scalar_prefetch = 0 : i64, scratch_operands = 0 : i64, tpu.core_type = #tpu.core_type<tc>, window_params = [{transform_indices = @transform_0, window_bounds = array<i64: 128, 128>}, {pipeline_mode = #tpu.pipeline_mode<synchronous>, transform_indices = @transform_1, window_bounds = array<i64: 128, 128>}, {pipeline_mode = #tpu.pipeline_mode<synchronous>, transform_indices = @transform_2, window_bounds = array<i64: 1, 128>}, {pipeline_mode = #tpu.pipeline_mode<synchronous>, transform_indices = @transform_3, window_bounds = array<i64: 128, 128>}, {pipeline_mode = #tpu.pipeline_mode<synchronous>, transform_indices = @transform_4, window_bounds = array<i64: 1, 128>}, {transform_indices = @transform_5, window_bounds = array<i64: 128, 128>}]} {
    %c0 = arith.constant 0 : index
    %c0_0 = arith.constant 0 : index
    %0 = vector.load %arg1[%c0, %c0_0] : memref<128x128xf32, #tpu.memory_space<vmem>>, vector<128x128xf32>
    %1 = arith.truncf %0 : vector<128x128xf32> to vector<128x128xbf16>
    %c0_1 = arith.constant 0 : index
    %c0_2 = arith.constant 0 : index
    %2 = vector.load %arg2[%c0_1, %c0_2] : memref<128x128xbf16, #tpu.memory_space<vmem>>, vector<128x128xbf16>
    %cst = arith.constant dense<0.000000e+00> : vector<128x128xf32>
    %3 = tpu.matmul %1, %2, %cst {dimension_numbers = #tpu.dot_dimension_numbers<[1], [0], [0], [1], [0, 0, 1, 1], [], []>} : vector<128x128xbf16>, vector<128x128xbf16>, vector<128x128xf32> -> vector<128x128xf32>
    %c0_3 = arith.constant 0 : index
    %c0_4 = arith.constant 0 : index
    %4 = vector.load %arg3[%c0_3, %c0_4] : memref<1x128xf32, #tpu.memory_space<vmem>>, vector<1x128xf32>
    %5 = vector.broadcast %4 : vector<1x128xf32> to vector<128x128xf32>
    %6 = arith.addf %3, %5 : vector<128x128xf32>
    %cst_5 = arith.constant 5.000000e-01 : f32
    %7 = vector.broadcast %cst_5 : f32 to vector<128x128xf32>
    %8 = arith.mulf %7, %6 : vector<128x128xf32>
    %cst_6 = arith.constant 5.000000e-01 : f32
    %9 = vector.broadcast %cst_6 : f32 to vector<128x128xf32>
    %10 = arith.mulf %9, %6 : vector<128x128xf32>
    %11 = math.tanh %10 : vector<128x128xf32>
    %cst_7 = arith.constant 1.000000e+00 : f32
    %12 = vector.broadcast %cst_7 : f32 to vector<128x128xf32>
    %13 = arith.addf %11, %12 : vector<128x128xf32>
    %14 = arith.mulf %8, %13 : vector<128x128xf32>
    %15 = arith.truncf %14 : vector<128x128xf32> to vector<128x128xbf16>
    %c0_8 = arith.constant 0 : index
    %c0_9 = arith.constant 0 : index
    %16 = vector.load %arg4[%c0_8, %c0_9] : memref<128x128xbf16, #tpu.memory_space<vmem>>, vector<128x128xbf16>
    %cst_10 = arith.constant dense<0.000000e+00> : vector<128x128xf32>
    %17 = tpu.matmul %15, %16, %cst_10 {dimension_numbers = #tpu.dot_dimension_numbers<[1], [0], [0], [1], [0, 0, 1, 1], [], []>} : vector<128x128xbf16>, vector<128x128xbf16>, vector<128x128xf32> -> vector<128x128xf32>
    %c0_11 = arith.constant 0 : index
    %c0_12 = arith.constant 0 : index
    %18 = vector.load %arg5[%c0_11, %c0_12] : memref<1x128xf32, #tpu.memory_space<vmem>>, vector<1x128xf32>
    %19 = vector.broadcast %18 : vector<1x128xf32> to vector<128x128xf32>
    %20 = arith.addf %17, %19 : vector<128x128xf32>
    %cst_13 = arith.constant 5.000000e-01 : f32
    %21 = vector.broadcast %cst_13 : f32 to vector<128x128xf32>
    %22 = arith.mulf %21, %20 : vector<128x128xf32>
    %cst_14 = arith.constant 5.000000e-01 : f32
    %23 = vector.broadcast %cst_14 : f32 to vector<128x128xf32>
    %24 = arith.mulf %23, %20 : vector<128x128xf32>
    %25 = math.tanh %24 : vector<128x128xf32>
    %cst_15 = arith.constant 1.000000e+00 : f32
    %26 = vector.broadcast %cst_15 : f32 to vector<128x128xf32>
    %27 = arith.addf %25, %26 : vector<128x128xf32>
    %28 = arith.mulf %22, %27 : vector<128x128xf32>
    %29 = arith.addf %0, %28 : vector<128x128xf32>
    %c0_16 = arith.constant 0 : index
    %c0_17 = arith.constant 0 : index
    %30 = vector.load %arg6[%c0_16, %c0_17] : memref<128x128xf32, #tpu.memory_space<vmem>>, vector<128x128xf32>
    tpu.vector_store %arg6[%c0_16, %c0_17], %29 {strides = array<i32>} : memref<128x128xf32, #tpu.memory_space<vmem>>, vector<128x128xf32>,
    return
  }
  func.func @transform_0(%arg0: i32) -> (i32, i32) {
    %c0_i32 = arith.constant 0 : i32
    %c0_i32_0 = arith.constant 0 : i32
    return %arg0, %c0_i32 : i32, i32
  }
  func.func @transform_1(%arg0: i32) -> (i32, i32) {
    %c0_i32 = arith.constant 0 : i32
    %c0_i32_0 = arith.constant 0 : i32
    %c0_i32_1 = arith.constant 0 : i32
    return %c0_i32, %c0_i32_0 : i32, i32
  }
  func.func @transform_2(%arg0: i32) -> (i32, i32) {
    %c0_i32 = arith.constant 0 : i32
    %c0_i32_0 = arith.constant 0 : i32
    %c0_i32_1 = arith.constant 0 : i32
    return %c0_i32, %c0_i32_0 : i32, i32
  }
  func.func @transform_3(%arg0: i32) -> (i32, i32) {
    %c0_i32 = arith.constant 0 : i32
    %c0_i32_0 = arith.constant 0 : i32
    %c0_i32_1 = arith.constant 0 : i32
    return %c0_i32, %c0_i32_0 : i32, i32
  }
  func.func @transform_4(%arg0: i32) -> (i32, i32) {
    %c0_i32 = arith.constant 0 : i32
    %c0_i32_0 = arith.constant 0 : i32
    %c0_i32_1 = arith.constant 0 : i32
    return %c0_i32, %c0_i32_0 : i32, i32
  }
  func.func @transform_5(%arg0: i32) -> (i32, i32) {
    %c0_i32 = arith.constant 0 : i32
    %c0_i32_0 = arith.constant 0 : i32
    return %arg0, %c0_i32 : i32, i32
  }
}

</mosaic_0001>

<llo_original>
// kernel: tpu_custom_call.1
$region0: #{tpu_custom_call.1}
  #allocation0 [shape = 'u32[]', space=smem, size = 0x4, offset = 0x4, fixed_abs, tag = 'smem constant byte address 0x4 - core index']
  #allocation1 [shape = 'u32[72,128]{1,0:T(1,128)}', space=vmem, size = 0x9000, scoped, tag = 'internal scratch']
  %s0 = inlined_call_operand.hbm [shape: f32[256,128], index: 0, kind: input, shape index: {}]
  %s1 = inlined_call_operand.hbm [shape: bf16[128,128], index: 1, kind: input, shape index: {}]
  %s2 = inlined_call_operand.vmem [shape: f32[1,128], index: 2, kind: input, shape index: {}]
  %s3 = inlined_call_operand.hbm [shape: bf16[128,128], index: 3, kind: input, shape index: {}]
  %s4 = inlined_call_operand.vmem [shape: f32[1,128], index: 4, kind: input, shape index: {}]
  %s5 = inlined_call_operand.hbm [shape: f32[256,128], index: 5, kind: output, shape index: {}]
  %s6 = sld [smem:[#allocation0]]
  $region65: #{tpu_custom_call.1} parent=0
    _
  %s8 = ssub.s32 1, %s6
  %s9 = scalar_select 0, %s8, %s6
  $region1: #{tpu_custom_call.1} parent=0
    #allocation2 [shape = 'u8[131072]{0}', space=vmem, size = 0x20000, scoped, tag = 'input window, operand 0']
    #allocation3 [shape = 's32[2]{0}', space=sflag, size = 0x8, scoped, tag = 'scoped memory for tpu_custom_call.1']
    #allocation4 [shape = 's32[2]{0}', space=sflag, size = 0x8, scoped, tag = 'scoped memory for tpu_custom_call.1']
    #allocation5 [shape = 'u8[32768]{0}', space=vmem, size = 0x8000, scoped, tag = 'input window, operand 1, single buffered']
    #allocation6 [shape = 's32[1]{0}', space=sflag, size = 0x4, scoped, tag = 'scoped memory for tpu_custom_call.1']
    #allocation7 [shape = 'u8[32768]{0}', space=vmem, size = 0x8000, scoped, tag = 'input window, operand 3, single buffered']
    #allocation8 [shape = 'u8[131072]{0}', space=vmem, size = 0x20000, scoped, tag = 'output window, operand 0']
    %10 = vsyncpa [#allocation3], 0
    %s11 = scalar_lea.sflag [#allocation3], 1
    %12 = vsyncpa %s11, 0
    %13 = vsyncpa [#allocation6], 0
    %14 = vsyncpa [#allocation4], 0
    %s15 = scalar_lea.sflag [#allocation4], 1
    %16 = vsyncpa %s15, 0
    loop: start=0, step=1, limit=4
    $region2: #{tpu_custom_call.1} parent=1 // loop_pre_header
      _
    $region3: #{tpu_custom_call.1} parent=1 // loop_header
      %s18 = sphi 0, %s22
      %p19 = scmp.ge.s32.totalorder %s18, 4
      %s28 = sphi 0, %s30
      %s31 = sphi 0, %s28
      %s32 = sphi 0, %s31
      %s48 = sphi 0, %s32
      %s52 = sphi 0, %s52
      %s54 = sphi 0, %s52
      %s55 = sphi 0, %s54
      %s69 = sphi 0, %s55
      %s73 = sphi 0, %s73
      %s75 = sphi 0, %s73
      %s76 = sphi 0, %s75
      %s90 = sphi 0, %s76
      %s94 = sphi 0, %s94
      %s96 = sphi 0, %s94
      %s97 = sphi 0, %s96
      %s111 = sphi 0, %s97
      %s115 = sphi 0, %s115
      %s117 = sphi 0, %s115
      %s118 = sphi 0, %s117
      %s132 = sphi 0, %s118
      %s138 = sphi 0, %s140
      %s141 = sphi 0, %s138
      %s142 = sphi 0, %s141
      %s158 = sphi 0, %s142
    $region4: #{tpu_custom_call.1} parent=1 // loop_header_branch
      %21 = sbr.rel (%p19) target = $region8
    $region5: #{tpu_custom_call.1} parent=1 // loop_body
      %s23 = ssub.s32 %s18, 1
      %s24 = ssub.s32 %s18, 2
      %s25 = sadd.s32 %s18, 1
      %s26 = ssub.s32 %s18, %s25
      %p27 = scmp.eq.s32.totalorder %s26, 0
      %s29 = sadd.s32 %s28, 1
      %s30 = scalar_select %p27, %s28, %s29
      %p33 = pneg %p27
      %p34 = scmp.eq.s32.totalorder %s18, 1
      %p35 = por %p33, %p34
      %p36 = scmp.ne.s32.totalorder %s28, %s31
      %p37 = scmp.eq.s32.totalorder %s18, 0
      %p38 = por %p36, %p37
      %p39 = scmp.ne.s32.totalorder %s28, %s31
      %p40 = scmp.eq.s32.totalorder %s23, 1
      %p41 = por %p39, %p40
      %p42 = scmp.ne.s32.totalorder %s31, %s32
      %p43 = scmp.eq.s32.totalorder %s23, 0
      %p44 = por %p42, %p43
      %p45 = scmp.ne.s32.totalorder %s31, %s32
      %p46 = scmp.eq.s32.totalorder %s24, 1
      %p47 = por %p45, %p46
      %p49 = scmp.ne.s32.totalorder %s32, %s48
      %p50 = scmp.eq.s32.totalorder %s24, 0
      %p51 = por %p49, %p50
      %s53 = sadd.s32 %s52, 1
      %p56 = scmp.eq.s32.totalorder %s18, 1
      %p57 = scmp.ne.s32.totalorder %s52, %s54
      %p58 = scmp.eq.s32.totalorder %s18, 0
      %p59 = por %p57, %p58
      %p60 = scmp.ne.s32.totalorder %s52, %s54
      %p61 = scmp.eq.s32.totalorder %s23, 1
      %p62 = por %p60, %p61
      %p63 = scmp.ne.s32.totalorder %s54, %s55
      %p64 = scmp.eq.s32.totalorder %s23, 0
      %p65 = por %p63, %p64
      %p66 = scmp.ne.s32.totalorder %s54, %s55
      %p67 = scmp.eq.s32.totalorder %s24, 1
      %p68 = por %p66, %p67
      %p70 = scmp.ne.s32.totalorder %s55, %s69
      %p71 = scmp.eq.s32.totalorder %s24, 0
      %p72 = por %p70, %p71
      %s74 = sadd.s32 %s73, 1
      %p77 = scmp.eq.s32.totalorder %s18, 1
      %p78 = scmp.ne.s32.totalorder %s73, %s75
      %p79 = scmp.eq.s32.totalorder %s18, 0
      %p80 = por %p78, %p79
      %p81 = scmp.ne.s32.totalorder %s73, %s75
      %p82 = scmp.eq.s32.totalorder %s23, 1
      %p83 = por %p81, %p82
      %p84 = scmp.ne.s32.totalorder %s75, %s76
      %p85 = scmp.eq.s32.totalorder %s23, 0
      %p86 = por %p84, %p85
      %p87 = scmp.ne.s32.totalorder %s75, %s76
      %p88 = scmp.eq.s32.totalorder %s24, 1
      %p89 = por %p87, %p88
      %p91 = scmp.ne.s32.totalorder %s76, %s90
      %p92 = scmp.eq.s32.totalorder %s24, 0
      %p93 = por %p91, %p92
      %s95 = sadd.s32 %s94, 1
      %p98 = scmp.eq.s32.totalorder %s18, 1
      %p99 = scmp.ne.s32.totalorder %s94, %s96
      %p100 = scmp.eq.s32.totalorder %s18, 0
      %p101 = por %p99, %p100
      %p102 = scmp.ne.s32.totalorder %s94, %s96
      %p103 = scmp.eq.s32.totalorder %s23, 1
      %p104 = por %p102, %p103
      %p105 = scmp.ne.s32.totalorder %s96, %s97
      %p106 = scmp.eq.s32.totalorder %s23, 0
      %p107 = por %p105, %p106
      %p108 = scmp.ne.s32.totalorder %s96, %s97
      %p109 = scmp.eq.s32.totalorder %s24, 1
      %p110 = por %p108, %p109
      %p112 = scmp.ne.s32.totalorder %s97, %s111
      %p113 = scmp.eq.s32.totalorder %s24, 0
      %p114 = por %p112, %p113
      %s116 = sadd.s32 %s115, 1
      %p119 = scmp.eq.s32.totalorder %s18, 1
      %p120 = scmp.ne.s32.totalorder %s115, %s117
      %p121 = scmp.eq.s32.totalorder %s18, 0
      %p122 = por %p120, %p121
      %p123 = scmp.ne.s32.totalorder %s115, %s117
      %p124 = scmp.eq.s32.totalorder %s23, 1
      %p125 = por %p123, %p124
      %p126 = scmp.ne.s32.totalorder %s117, %s118
      %p127 = scmp.eq.s32.totalorder %s23, 0
      %p128 = por %p126, %p127
      %p129 = scmp.ne.s32.totalorder %s117, %s118
      %p130 = scmp.eq.s32.totalorder %s24, 1
      %p131 = por %p129, %p130
      %p133 = scmp.ne.s32.totalorder %s118, %s132
      %p134 = scmp.eq.s32.totalorder %s24, 0
      %p135 = por %p133, %p134
      %s136 = ssub.s32 %s18, %s25
      %p137 = scmp.eq.s32.totalorder %s136, 0
      %s139 = sadd.s32 %s138, 1
      %s140 = scalar_select %p137, %s138, %s139
      %p143 = pneg %p137
      %p144 = scmp.eq.s32.totalorder %s18, 1
      %p145 = por %p143, %p144
      %p146 = scmp.ne.s32.totalorder %s138, %s141
      %p147 = scmp.eq.s32.totalorder %s18, 0
      %p148 = por %p146, %p147
      %p149 = scmp.ne.s32.totalorder %s138, %s141
      %p150 = scmp.eq.s32.totalorder %s23, 1
      %p151 = por %p149, %p150
      %p152 = scmp.ne.s32.totalorder %s141, %s142
      %p153 = scmp.eq.s32.totalorder %s23, 0
      %p154 = por %p152, %p153
      %p155 = scmp.ne.s32.totalorder %s141, %s142
      %p156 = scmp.eq.s32.totalorder %s24, 1
      %p157 = por %p155, %p156
      %p159 = scmp.ne.s32.totalorder %s142, %s158
      %p160 = scmp.eq.s32.totalorder %s24, 0
      %p161 = por %p159, %p160
      %p162 = scmp.le.s32.totalorder 1, %s18
      %p163 = scmp.lt.s32.totalorder %s18, 3
      %p164 = pnand %p162, %p163
      %p165 = pneg %p164
      // Predicated region
      $region9: #{tpu_custom_call.1} parent=5 // pred_check
        _
      $region10: #{tpu_custom_call.1} parent=5 // pred_check_branch
        %167 = sbr.rel (%p164) target = $region12
      $region11: #{tpu_custom_call.1} parent=5 // pred_region
        %s168 = ssub.s32 %s18, 1
        // Predicated region
        $region13: #{tpu_custom_call.1} parent=11 // pred_check
          %p169 = pneg %p65
        $region14: #{tpu_custom_call.1} parent=11 // pred_check_branch
          %171 = sbr.rel (%p169) target = $region16
        $region15: #{tpu_custom_call.1} parent=11 // pred_region
          %173 = vsyncadd [#allocation6], 0
          %s174 = sshll.u32 %s1, 4
          %s175 = int_to_ptr.hbm [resolvable:$true] %s174
          %s176 = sshll.u32 [#allocation5], 4
          %s177 = int_to_ptr.vmem [resolvable:$true] %s176
          %182 = dma.hbm_to_vmem [thread:$0]  %s175, 1024, %s177, [#allocation6], 64, 64, 4
        $region16: #{tpu_custom_call.1} parent=11 // pred_fallthru
          _
        // Predicated region
        $region17: #{tpu_custom_call.1} parent=11 // pred_check
          %p183 = pneg %p86
        $region18: #{tpu_custom_call.1} parent=11 // pred_check_branch
          %185 = sbr.rel (%p183) target = $region20
        $region19: #{tpu_custom_call.1} parent=11 // pred_region
          _
        $region20: #{tpu_custom_call.1} parent=11 // pred_fallthru
          _
        // Predicated region
        $region21: #{tpu_custom_call.1} parent=11 // pred_check
          %p186 = pneg %p107
        $region22: #{tpu_custom_call.1} parent=11 // pred_check_branch
          %188 = sbr.rel (%p186) target = $region24
        $region23: #{tpu_custom_call.1} parent=11 // pred_region
          %190 = vsyncadd [#allocation6], 0
          %s191 = sshll.u32 %s3, 4
          %s192 = int_to_ptr.hbm [resolvable:$true] %s191
          %s193 = sshll.u32 [#allocation7], 4
          %s194 = int_to_ptr.vmem [resolvable:$true] %s193
          %199 = dma.hbm_to_vmem [thread:$0]  %s192, 1024, %s194, [#allocation6], 64, 64, 4
        $region24: #{tpu_custom_call.1} parent=11 // pred_fallthru
          _
        // Predicated region
        $region25: #{tpu_custom_call.1} parent=11 // pred_check
          %p200 = pneg %p128
        $region26: #{tpu_custom_call.1} parent=11 // pred_check_branch
          %202 = sbr.rel (%p200) target = $region28
        $region27: #{tpu_custom_call.1} parent=11 // pred_region
          _
        $region28: #{tpu_custom_call.1} parent=11 // pred_fallthru
          _
      $region12: #{tpu_custom_call.1} parent=5 // pred_fallthru
        _
      %p203 = scmp.lt.s32.totalorder %s18, 2
      // Predicated region
      $region29: #{tpu_custom_call.1} parent=5 // pred_check
        %p204 = pneg %p203
      $region30: #{tpu_custom_call.1} parent=5 // pred_check_branch
        %206 = sbr.rel (%p204) target = $region32
      $region31: #{tpu_custom_call.1} parent=5 // pred_region
        // Predicated region
        $region33: #{tpu_custom_call.1} parent=31 // pred_check
          %p207 = pneg %p38
        $region34: #{tpu_custom_call.1} parent=31 // pred_check_branch
          %209 = sbr.rel (%p207) target = $region36
        $region35: #{tpu_custom_call.1} parent=31 // pred_region
          %s210 = sand.u32 %s28, 1
          %s211 = scalar_lea.sflag [#allocation3], %s210
          %s212 = sand.u32 %s28, 1
          %s213 = smul.addr %s212, 128
          %s214 = scalar_lea.vmem [#allocation2], %s213
          %s215 = smul.u32 16, %s18
          %217 = vsyncadd %s211, 0
          %s218 = smul.addr %s215, 8
          %s219 = scalar_lea.hbm %s0, %s218
          %s220 = sshll.u32 %s219, 4
          %s221 = int_to_ptr.hbm [resolvable:$true] %s220
          %s222 = sshll.u32 %s214, 4
          %s223 = int_to_ptr.vmem [resolvable:$true] %s222
          %228 = dma.hbm_to_vmem [thread:$0]  %s221, 2048, %s223, %s211, 128, 128, 8
        $region36: #{tpu_custom_call.1} parent=31 // pred_fallthru
          _
      $region32: #{tpu_custom_call.1} parent=5 // pred_fallthru
        _
      %p229 = scmp.le.s32.totalorder 1, %s18
      %p230 = scmp.lt.s32.totalorder %s18, 3
      %p231 = pnand %p229, %p230
      %p232 = pneg %p231
      // Predicated region
      $region37: #{tpu_custom_call.1} parent=5 // pred_check
        _
      $region38: #{tpu_custom_call.1} parent=5 // pred_check_branch
        %234 = sbr.rel (%p231) target = $region40
      $region39: #{tpu_custom_call.1} parent=5 // pred_region
        %s235 = ssub.s32 %s18, 1
        %s236 = sand.u32 %s31, 1
        %s237 = scalar_lea.sflag [#allocation3], %s236
        %s238 = sand.u32 %s31, 1
        %s239 = smul.addr %s238, 128
        %s240 = scalar_lea.vmem [#allocation2], %s239
        // Predicated region
        $region41: #{tpu_custom_call.1} parent=39 // pred_check
          %p241 = pneg %p44
        $region42: #{tpu_custom_call.1} parent=39 // pred_check_branch
          %243 = sbr.rel (%p241) target = $region44
        $region43: #{tpu_custom_call.1} parent=39 // pred_region
          %245 = dma.done %s237, 2048
        $region44: #{tpu_custom_call.1} parent=39 // pred_fallthru
          _
        // Predicated region
        $region45: #{tpu_custom_call.1} parent=39 // pred_check
          %p246 = pneg %p65
        $region46: #{tpu_custom_call.1} parent=39 // pred_check_branch
          %248 = sbr.rel (%p246) target = $region48
        $region47: #{tpu_custom_call.1} parent=39 // pred_region
          %250 = dma.done [#allocation6], 1024
        $region48: #{tpu_custom_call.1} parent=39 // pred_fallthru
          _
        // Predicated region
        $region49: #{tpu_custom_call.1} parent=39 // pred_check
          %p251 = pneg %p107
        $region50: #{tpu_custom_call.1} parent=39 // pred_check_branch
          %253 = sbr.rel (%p251) target = $region52
        $region51: #{tpu_custom_call.1} parent=39 // pred_region
          %255 = dma.done [#allocation6], 1024
        $region52: #{tpu_custom_call.1} parent=39 // pred_fallthru
          _
        %s256 = sand.u32 %s31, 1
        %s257 = scalar_lea.sflag [#allocation3], %s256
        %s258 = sand.u32 %s31, 1
        %s259 = smul.addr %s258, 128
        %s260 = scalar_lea.vmem [#allocation2], %s259
        %p261 = pneg %p44
        %p262 = pneg %p41
        %p263 = pneg %p65
        %p264 = pneg %p62
        %p265 = pneg %p86
        %p266 = pneg %p83
        %p267 = pneg %p107
        %p268 = pneg %p104
        %p269 = pneg %p128
        %p270 = pneg %p125
        %p271 = pneg %p154
        %p272 = pneg %p151
        %s273 = sand.u32 %s141, 1
        %s274 = scalar_lea.sflag [#allocation4], %s273
        %s275 = sand.u32 %s141, 1
        %s276 = smul.addr %s275, 128
        %s277 = scalar_lea.vmem [#allocation8], %s276
        %s278 = smul.u32 16, %s23
        %s279 = smul.u32 16, %s23
        %v280 = vld [vmem:[%s240] sm:$0xff]
        %v281 = vld [vmem:[%s240 + $0x8] sm:$0xff]
        %v282 = vld [vmem:[%s240 + $0x10] sm:$0xff]
        %v283 = vld [vmem:[%s240 + $0x18] sm:$0xff]
        %v284 = vld [vmem:[%s240 + $0x20] sm:$0xff]
        %v285 = vld [vmem:[%s240 + $0x28] sm:$0xff]
        %v286 = vld [vmem:[%s240 + $0x30] sm:$0xff]
        %v287 = vld [vmem:[%s240 + $0x38] sm:$0xff]
        %v288 = vld [vmem:[%s240 + $0x40] sm:$0xff]
        %v289 = vld [vmem:[%s240 + $0x48] sm:$0xff]
        %v290 = vld [vmem:[%s240 + $0x50] sm:$0xff]
        %v291 = vld [vmem:[%s240 + $0x58] sm:$0xff]
        %v292 = vld [vmem:[%s240 + $0x60] sm:$0xff]
        %v293 = vld [vmem:[%s240 + $0x68] sm:$0xff]
        %v294 = vld [vmem:[%s240 + $0x70] sm:$0xff]
        %v295 = vld [vmem:[%s240 + $0x78] sm:$0xff]
        %v296 = vpack.c.bf16 %v281, %v280
        %v297 = vpack.c.bf16 %v283, %v282
        %v298 = vpack.c.bf16 %v285, %v284
        %v299 = vpack.c.bf16 %v287, %v286
        %v300 = vpack.c.bf16 %v289, %v288
        %v301 = vpack.c.bf16 %v291, %v290
        %v302 = vpack.c.bf16 %v293, %v292
        %v303 = vpack.c.bf16 %v295, %v294
        %v304 = vld [vmem:[#allocation5] sm:$0xf]
        %v305 = vld [vmem:[#allocation5 + $0x4] sm:$0xf]
        %v306 = vld [vmem:[#allocation5 + $0x8] sm:$0xf]
        %v307 = vld [vmem:[#allocation5 + $0xc] sm:$0xf]
        %v308 = vld [vmem:[#allocation5 + $0x10] sm:$0xf]
        %v309 = vld [vmem:[#allocation5 + $0x14] sm:$0xf]
        %v310 = vld [vmem:[#allocation5 + $0x18] sm:$0xf]
        %v311 = vld [vmem:[#allocation5 + $0x1c] sm:$0xf]
        %v312 = vld [vmem:[#allocation5 + $0x20] sm:$0xf]
        %v313 = vld [vmem:[#allocation5 + $0x24] sm:$0xf]
        %v314 = vld [vmem:[#allocation5 + $0x28] sm:$0xf]
        %v315 = vld [vmem:[#allocation5 + $0x2c] sm:$0xf]
        %v316 = vld [vmem:[#allocation5 + $0x30] sm:$0xf]
        %v317 = vld [vmem:[#allocation5 + $0x34] sm:$0xf]
        %v318 = vld [vmem:[#allocation5 + $0x38] sm:$0xf]
        %v319 = vld [vmem:[#allocation5 + $0x3c] sm:$0xf]
        %v320 = vld [vmem:[%s2] sm:$0x1]
        %v322 = vperm.slane %v320, 0
        %v340 = vunpack.c.l.b16 %v304
        %v341 = vunpack.c.l.b16 %v305
        %v342 = vunpack.c.l.b16 %v306
        %v343 = vunpack.c.l.b16 %v307
        %v344 = vunpack.c.l.b16 %v308
        %v345 = vunpack.c.l.b16 %v309
        %v346 = vunpack.c.l.b16 %v310
        %v347 = vunpack.c.l.b16 %v311
        %v348 = vunpack.c.l.b16 %v312
        %v349 = vunpack.c.l.b16 %v313
        %v350 = vunpack.c.l.b16 %v314
        %v351 = vunpack.c.l.b16 %v315
        %v352 = vunpack.c.l.b16 %v316
        %v353 = vunpack.c.l.b16 %v317
        %v354 = vunpack.c.l.b16 %v318
        %v355 = vunpack.c.l.b16 %v319
        %v356 = vpack.c.b16 %v341, %v340
        %v357 = vpack.c.b16 %v343, %v342
        %v358 = vpack.c.b16 %v345, %v344
        %v359 = vpack.c.b16 %v347, %v346
        %v360 = vpack.c.b16 %v349, %v348
        %v361 = vpack.c.b16 %v351, %v350
        %v362 = vpack.c.b16 %v353, %v352
        %v363 = vpack.c.b16 %v355, %v354
        %372 = vmatpush.bf16.msra.mxu0 %v363
        %373 = vmatpush.bf16.msra.mxu0 %v362
        %374 = vmatpush.bf16.msra.mxu0 %v361
        %375 = vmatpush.bf16.msra.mxu0 %v360
        %376 = vmatpush.bf16.msra.mxu0 %v359
        %377 = vmatpush.bf16.msra.mxu0 %v358
        %378 = vmatpush.bf16.msra.mxu0 %v357
        %379 = vmatpush.bf16.msra.mxu0 %v356
        %380 = vmatmul.bf16.gmra.mxu0 %v296
        %v381 = vpop.f32.mrf.mxu0
        %v382 = vadd.f32 %v322, %v381
        %v383 = vpop.f32.mrf.mxu0
        %v384 = vadd.f32 %v322, %v383
        %385 = vmatmul.bf16.gmra.mxu0 %v297
        %v386 = vpop.f32.mrf.mxu0
        %v387 = vadd.f32 %v322, %v386
        %v388 = vpop.f32.mrf.mxu0
        %v389 = vadd.f32 %v322, %v388
        %390 = vmatmul.bf16.gmra.mxu0 %v298
        %v391 = vpop.f32.mrf.mxu0
        %v392 = vadd.f32 %v322, %v391
        %v393 = vpop.f32.mrf.mxu0
        %v394 = vadd.f32 %v322, %v393
        %395 = vmatmul.bf16.gmra.mxu0 %v299
        %v396 = vpop.f32.mrf.mxu0
        %v397 = vadd.f32 %v322, %v396
        %v398 = vpop.f32.mrf.mxu0
        %v399 = vadd.f32 %v322, %v398
        %400 = vmatmul.bf16.gmra.mxu0 %v300
        %v401 = vpop.f32.mrf.mxu0
        %v402 = vadd.f32 %v322, %v401
        %v403 = vpop.f32.mrf.mxu0
        %v404 = vadd.f32 %v322, %v403
        %405 = vmatmul.bf16.gmra.mxu0 %v301
        %v406 = vpop.f32.mrf.mxu0
        %v407 = vadd.f32 %v322, %v406
        %v408 = vpop.f32.mrf.mxu0
        %v409 = vadd.f32 %v322, %v408
        %410 = vmatmul.bf16.gmra.mxu0 %v302
        %v411 = vpop.f32.mrf.mxu0
        %v412 = vadd.f32 %v322, %v411
        %v413 = vpop.f32.mrf.mxu0
        %v414 = vadd.f32 %v322, %v413
        %415 = vmatmul.bf16.gmra.mxu0 %v303
        %v416 = vpop.f32.mrf.mxu0
        %v417 = vadd.f32 %v322, %v416
        %v418 = vpop.f32.mrf.mxu0
        %v419 = vadd.f32 %v322, %v418
        %420 = vdwg.mxu0
        %v421 = vmul.f32 %v382, 0.5
        %v422 = vmul.f32 %v384, 0.5
        %v423 = vmul.f32 %v387, 0.5
        %v424 = vmul.f32 %v389, 0.5
        %v425 = vmul.f32 %v392, 0.5
        %v426 = vmul.f32 %v394, 0.5
        %v427 = vmul.f32 %v397, 0.5
        %v428 = vmul.f32 %v399, 0.5
        %v429 = vmul.f32 %v402, 0.5
        %v430 = vmul.f32 %v404, 0.5
        %v431 = vmul.f32 %v407, 0.5
        %v432 = vmul.f32 %v409, 0.5
        %v433 = vmul.f32 %v412, 0.5
        %v434 = vmul.f32 %v414, 0.5
        %v435 = vmul.f32 %v417, 0.5
        %v436 = vmul.f32 %v419, 0.5
        %v437 = vtanh.pop %v421
        %v438 = vtanh.pop %v422
        %v439 = vtanh.pop %v423
        %v440 = vtanh.pop %v424
        %v441 = vtanh.pop %v425
        %v442 = vtanh.pop %v426
        %v443 = vtanh.pop %v427
        %v444 = vtanh.pop %v428
        %v445 = vtanh.pop %v429
        %v446 = vtanh.pop %v430
        %v447 = vtanh.pop %v431
        %v448 = vtanh.pop %v432
        %v449 = vtanh.pop %v433
        %v450 = vtanh.pop %v434
        %v451 = vtanh.pop %v435
        %v452 = vtanh.pop %v436
        %v453 = vadd.f32 %v437, 1.0
        %v454 = vadd.f32 %v438, 1.0
        %v455 = vadd.f32 %v439, 1.0
        %v456 = vadd.f32 %v440, 1.0
        %v457 = vadd.f32 %v441, 1.0
        %v458 = vadd.f32 %v442, 1.0
        %v459 = vadd.f32 %v443, 1.0
        %v460 = vadd.f32 %v444, 1.0
        %v461 = vadd.f32 %v445, 1.0
        %v462 = vadd.f32 %v446, 1.0
        %v463 = vadd.f32 %v447, 1.0
        %v464 = vadd.f32 %v448, 1.0
        %v465 = vadd.f32 %v449, 1.0
        %v466 = vadd.f32 %v450, 1.0
        %v467 = vadd.f32 %v451, 1.0
        %v468 = vadd.f32 %v452, 1.0
        %v469 = vmul.f32 %v421, %v453
        %v470 = vmul.f32 %v422, %v454
        %v471 = vmul.f32 %v423, %v455
        %v472 = vmul.f32 %v424, %v456
        %v473 = vmul.f32 %v425, %v457
        %v474 = vmul.f32 %v426, %v458
        %v475 = vmul.f32 %v427, %v459
        %v476 = vmul.f32 %v428, %v460
        %v477 = vmul.f32 %v429, %v461
        %v478 = vmul.f32 %v430, %v462
        %v479 = vmul.f32 %v431, %v463
        %v480 = vmul.f32 %v432, %v464
        %v481 = vmul.f32 %v433, %v465
        %v482 = vmul.f32 %v434, %v466
        %v483 = vmul.f32 %v435, %v467
        %v484 = vmul.f32 %v436, %v468
        %v485 = vpack.c.bf16 %v470, %v469
        %v486 = vpack.c.bf16 %v472, %v471
        %v487 = vpack.c.bf16 %v474, %v473
        %v488 = vpack.c.bf16 %v476, %v475
        %v489 = vpack.c.bf16 %v478, %v477
        %v490 = vpack.c.bf16 %v480, %v479
        %v491 = vpack.c.bf16 %v482, %v481
        %v492 = vpack.c.bf16 %v484, %v483
        %v493 = vld [vmem:[#allocation7] sm:$0xf]
        %v494 = vld [vmem:[#allocation7 + $0x4] sm:$0xf]
        %v495 = vld [vmem:[#allocation7 + $0x8] sm:$0xf]
        %v496 = vld [vmem:[#allocation7 + $0xc] sm:$0xf]
        %v497 = vld [vmem:[#allocation7 + $0x10] sm:$0xf]
        %v498 = vld [vmem:[#allocation7 + $0x14] sm:$0xf]
        %v499 = vld [vmem:[#allocation7 + $0x18] sm:$0xf]
        %v500 = vld [vmem:[#allocation7 + $0x1c] sm:$0xf]
        %v501 = vld [vmem:[#allocation7 + $0x20] sm:$0xf]
        %v502 = vld [vmem:[#allocation7 + $0x24] sm:$0xf]
        %v503 = vld [vmem:[#allocation7 + $0x28] sm:$0xf]
        %v504 = vld [vmem:[#allocation7 + $0x2c] sm:$0xf]
        %v505 = vld [vmem:[#allocation7 + $0x30] sm:$0xf]
        %v506 = vld [vmem:[#allocation7 + $0x34] sm:$0xf]
        %v507 = vld [vmem:[#allocation7 + $0x38] sm:$0xf]
        %v508 = vld [vmem:[#allocation7 + $0x3c] sm:$0xf]
        %v509 = vld [vmem:[%s4] sm:$0x1]
        %v511 = vperm.slane %v509, 0
        %v529 = vunpack.c.l.b16 %v493
        %v530 = vunpack.c.l.b16 %v494
        %v531 = vunpack.c.l.b16 %v495
        %v532 = vunpack.c.l.b16 %v496
        %v533 = vunpack.c.l.b16 %v497
        %v534 = vunpack.c.l.b16 %v498
        %v535 = vunpack.c.l.b16 %v499
        %v536 = vunpack.c.l.b16 %v500
        %v537 = vunpack.c.l.b16 %v501
        %v538 = vunpack.c.l.b16 %v502
        %v539 = vunpack.c.l.b16 %v503
        %v540 = vunpack.c.l.b16 %v504
        %v541 = vunpack.c.l.b16 %v505
        %v542 = vunpack.c.l.b16 %v506
        %v543 = vunpack.c.l.b16 %v507
        %v544 = vunpack.c.l.b16 %v508
        %v545 = vpack.c.b16 %v530, %v529
        %v546 = vpack.c.b16 %v532, %v531
        %v547 = vpack.c.b16 %v534, %v533
        %v548 = vpack.c.b16 %v536, %v535
        %v549 = vpack.c.b16 %v538, %v537
        %v550 = vpack.c.b16 %v540, %v539
        %v551 = vpack.c.b16 %v542, %v541
        %v552 = vpack.c.b16 %v544, %v543
        %561 = vmatpush.bf16.msra.mxu0 %v552
        %562 = vmatpush.bf16.msra.mxu0 %v551
        %563 = vmatpush.bf16.msra.mxu0 %v550
        %564 = vmatpush.bf16.msra.mxu0 %v549
        %565 = vmatpush.bf16.msra.mxu0 %v548
        %566 = vmatpush.bf16.msra.mxu0 %v547
        %567 = vmatpush.bf16.msra.mxu0 %v546
        %568 = vmatpush.bf16.msra.mxu0 %v545
        %569 = vmatmul.bf16.gmra.mxu0 %v485
        %v570 = vpop.f32.mrf.mxu0
        %v571 = vadd.f32 %v511, %v570
        %v572 = vpop.f32.mrf.mxu0
        %v573 = vadd.f32 %v511, %v572
        %574 = vmatmul.bf16.gmra.mxu0 %v486
        %v575 = vpop.f32.mrf.mxu0
        %v576 = vadd.f32 %v511, %v575
        %v577 = vpop.f32.mrf.mxu0
        %v578 = vadd.f32 %v511, %v577
        %579 = vmatmul.bf16.gmra.mxu0 %v487
        %v580 = vpop.f32.mrf.mxu0
        %v581 = vadd.f32 %v511, %v580
        %v582 = vpop.f32.mrf.mxu0
        %v583 = vadd.f32 %v511, %v582
        %584 = vmatmul.bf16.gmra.mxu0 %v488
        %v585 = vpop.f32.mrf.mxu0
        %v586 = vadd.f32 %v511, %v585
        %v587 = vpop.f32.mrf.mxu0
        %v588 = vadd.f32 %v511, %v587
        %589 = vmatmul.bf16.gmra.mxu0 %v489
        %v590 = vpop.f32.mrf.mxu0
        %v591 = vadd.f32 %v511, %v590
        %v592 = vpop.f32.mrf.mxu0
        %v593 = vadd.f32 %v511, %v592
        %594 = vmatmul.bf16.gmra.mxu0 %v490
        %v595 = vpop.f32.mrf.mxu0
        %v596 = vadd.f32 %v511, %v595
        %v597 = vpop.f32.mrf.mxu0
        %v598 = vadd.f32 %v511, %v597
        %599 = vmatmul.bf16.gmra.mxu0 %v491
        %v600 = vpop.f32.mrf.mxu0
        %v601 = vadd.f32 %v511, %v600
        %v602 = vpop.f32.mrf.mxu0
        %v603 = vadd.f32 %v511, %v602
        %604 = vmatmul.bf16.gmra.mxu0 %v492
        %v605 = vpop.f32.mrf.mxu0
        %v606 = vadd.f32 %v511, %v605
        %v607 = vpop.f32.mrf.mxu0
        %v608 = vadd.f32 %v511, %v607
        %609 = vdwg.mxu0
        %v610 = vmul.f32 %v571, 0.5
        %v611 = vmul.f32 %v573, 0.5
        %v612 = vmul.f32 %v576, 0.5
        %v613 = vmul.f32 %v578, 0.5
        %v614 = vmul.f32 %v581, 0.5
        %v615 = vmul.f32 %v583, 0.5
        %v616 = vmul.f32 %v586, 0.5
        %v617 = vmul.f32 %v588, 0.5
        %v618 = vmul.f32 %v591, 0.5
        %v619 = vmul.f32 %v593, 0.5
        %v620 = vmul.f32 %v596, 0.5
        %v621 = vmul.f32 %v598, 0.5
        %v622 = vmul.f32 %v601, 0.5
        %v623 = vmul.f32 %v603, 0.5
        %v624 = vmul.f32 %v606, 0.5
        %v625 = vmul.f32 %v608, 0.5
        %v626 = vtanh.pop %v610
        %v627 = vtanh.pop %v611
        %v628 = vtanh.pop %v612
        %v629 = vtanh.pop %v613
        %v630 = vtanh.pop %v614
        %v631 = vtanh.pop %v615
        %v632 = vtanh.pop %v616
        %v633 = vtanh.pop %v617
        %v634 = vtanh.pop %v618
        %v635 = vtanh.pop %v619
        %v636 = vtanh.pop %v620
        %v637 = vtanh.pop %v621
        %v638 = vtanh.pop %v622
        %v639 = vtanh.pop %v623
        %v640 = vtanh.pop %v624
        %v641 = vtanh.pop %v625
        %v642 = vadd.f32 %v626, 1.0
        %v643 = vadd.f32 %v627, 1.0
        %v644 = vadd.f32 %v628, 1.0
        %v645 = vadd.f32 %v629, 1.0
        %v646 = vadd.f32 %v630, 1.0
        %v647 = vadd.f32 %v631, 1.0
        %v648 = vadd.f32 %v632, 1.0
        %v649 = vadd.f32 %v633, 1.0
        %v650 = vadd.f32 %v634, 1.0
        %v651 = vadd.f32 %v635, 1.0
        %v652 = vadd.f32 %v636, 1.0
        %v653 = vadd.f32 %v637, 1.0
        %v654 = vadd.f32 %v638, 1.0
        %v655 = vadd.f32 %v639, 1.0
        %v656 = vadd.f32 %v640, 1.0
        %v657 = vadd.f32 %v641, 1.0
        %v658 = vmul.f32 %v610, %v642
        %v659 = vmul.f32 %v611, %v643
        %v660 = vmul.f32 %v612, %v644
        %v661 = vmul.f32 %v613, %v645
        %v662 = vmul.f32 %v614, %v646
        %v663 = vmul.f32 %v615, %v647
        %v664 = vmul.f32 %v616, %v648
        %v665 = vmul.f32 %v617, %v649
        %v666 = vmul.f32 %v618, %v650
        %v667 = vmul.f32 %v619, %v651
        %v668 = vmul.f32 %v620, %v652
        %v669 = vmul.f32 %v621, %v653
        %v670 = vmul.f32 %v622, %v654
        %v671 = vmul.f32 %v623, %v655
        %v672 = vmul.f32 %v624, %v656
        %v673 = vmul.f32 %v625, %v657
        %v674 = vadd.f32 %v280, %v658
        %v675 = vadd.f32 %v281, %v659
        %v676 = vadd.f32 %v282, %v660
        %v677 = vadd.f32 %v283, %v661
        %v678 = vadd.f32 %v284, %v662
        %v679 = vadd.f32 %v285, %v663
        %v680 = vadd.f32 %v286, %v664
        %v681 = vadd.f32 %v287, %v665
        %v682 = vadd.f32 %v288, %v666
        %v683 = vadd.f32 %v289, %v667
        %v684 = vadd.f32 %v290, %v668
        %v685 = vadd.f32 %v291, %v669
        %v686 = vadd.f32 %v292, %v670
        %v687 = vadd.f32 %v293, %v671
        %v688 = vadd.f32 %v294, %v672
        %v689 = vadd.f32 %v295, %v673
        %690 = vst [vmem:[%s277] sm:$0xff] %v674
        %691 = vst [vmem:[%s277 + $0x8] sm:$0xff] %v675
        %692 = vst [vmem:[%s277 + $0x10] sm:$0xff] %v676
        %693 = vst [vmem:[%s277 + $0x18] sm:$0xff] %v677
        %694 = vst [vmem:[%s277 + $0x20] sm:$0xff] %v678
        %695 = vst [vmem:[%s277 + $0x28] sm:$0xff] %v679
        %696 = vst [vmem:[%s277 + $0x30] sm:$0xff] %v680
        %697 = vst [vmem:[%s277 + $0x38] sm:$0xff] %v681
        %698 = vst [vmem:[%s277 + $0x40] sm:$0xff] %v682
        %699 = vst [vmem:[%s277 + $0x48] sm:$0xff] %v683
        %700 = vst [vmem:[%s277 + $0x50] sm:$0xff] %v684
        %701 = vst [vmem:[%s277 + $0x58] sm:$0xff] %v685
        %702 = vst [vmem:[%s277 + $0x60] sm:$0xff] %v686
        %703 = vst [vmem:[%s277 + $0x68] sm:$0xff] %v687
        %704 = vst [vmem:[%s277 + $0x70] sm:$0xff] %v688
        %705 = vst [vmem:[%s277 + $0x78] sm:$0xff] %v689
        %s706 = sand.u32 %s141, 1
        %s707 = scalar_lea.sflag [#allocation4], %s706
        %s708 = sand.u32 %s141, 1
        %s709 = smul.addr %s708, 128
        %s710 = scalar_lea.vmem [#allocation8], %s709
        // Predicated region
        $region53: #{tpu_custom_call.1} parent=39 // pred_check
          %p711 = pneg %p151
        $region54: #{tpu_custom_call.1} parent=39 // pred_check_branch
          %713 = sbr.rel (%p711) target = $region56
        $region55: #{tpu_custom_call.1} parent=39 // pred_region
          %s714 = smul.u32 16, %s23
          %716 = vsyncadd %s707, 0
          %s717 = smul.addr %s714, 8
          %s718 = scalar_lea.hbm %s5, %s717
          %s719 = sshll.u32 %s710, 4
          %s720 = int_to_ptr.vmem [resolvable:$true] %s719
          %s721 = sshll.u32 %s718, 4
          %s722 = int_to_ptr.hbm [resolvable:$true] %s721
          %727 = dma.vmem_to_hbm [thread:$0]  %s720, 2048, %s722, %s707, 128, 128, 8
        $region56: #{tpu_custom_call.1} parent=39 // pred_fallthru
          _
      $region40: #{tpu_custom_call.1} parent=5 // pred_fallthru
        _
      %p728 = scmp.le.s32.totalorder 2, %s18
      // Predicated region
      $region57: #{tpu_custom_call.1} parent=5 // pred_check
        %p729 = pneg %p728
      $region58: #{tpu_custom_call.1} parent=5 // pred_check_branch
        %731 = sbr.rel (%p729) target = $region60
      $region59: #{tpu_custom_call.1} parent=5 // pred_region
        %s732 = ssub.s32 %s18, 2
        // Predicated region
        $region61: #{tpu_custom_call.1} parent=59 // pred_check
          %p733 = pneg %p157
        $region62: #{tpu_custom_call.1} parent=59 // pred_check_branch
          %735 = sbr.rel (%p733) target = $region64
        $region63: #{tpu_custom_call.1} parent=59 // pred_region
          %s736 = sand.u32 %s142, 1
          %s737 = scalar_lea.sflag [#allocation4], %s736
          %s738 = sand.u32 %s142, 1
          %s739 = smul.addr %s738, 128
          %s740 = scalar_lea.vmem [#allocation8], %s739
          %742 = dma.done %s737, 2048
        $region64: #{tpu_custom_call.1} parent=59 // pred_fallthru
          _
      $region60: #{tpu_custom_call.1} parent=5 // pred_fallthru
        _
    $region6: #{tpu_custom_call.1} parent=1 // loop_footer
      %s22 = sadd.s32 1, %s18
    $region7: #{tpu_custom_call.1} parent=1 // loop_footer_branch
      %17 = sbr.rel target = $region3
    $region8: #{tpu_custom_call.1} parent=1 // loop_exit
      _
    %743 = vsyncpa [#allocation3], 1
    %s744 = scalar_lea.sflag [#allocation3], 1
    %745 = vsyncpa %s744, 1
    %746 = vsyncpa [#allocation6], 1
    %747 = vsyncpa [#allocation4], 1
    %s748 = scalar_lea.sflag [#allocation4], 1
    %749 = vsyncpa %s748, 1

</llo_original>
